<compile_context>
chip_gen: v7x
topology: tpu7x:2x2x1
jax: 0.10.0
libtpu: 0.0.40
codegen_flags: <defaults>
</compile_context>

<pallas_src>
import functools

import jax
import jax.numpy as jnp
from jax.experimental import pallas as pl
from jax.experimental.pallas import tpu as pltpu


def _edges_kernel(model_id, inv_batch,
                  gate_smem_ref,   # (N,)      f32 SMEM  : full gate table (scalar reads)
                  kl_gate_ref,     # (N, 1, 1) f32 VMEM  : gates with the self edge zeroed
                  labels_ref,      # (B, 1)    int32 VMEM: labels of the target model
                  outputs_ref,     # (N, B, C) f32 VMEM  : stacked logits of all models
                  out_ref):        # (1, 1)    f32 VMEM  : scalar loss (written once)
    logits = outputs_ref[...]                                  # (N, B, C)

    # log_softmax over classes, vectorized across all N edges in a single EUP pass.
    m = jnp.max(logits, axis=-1, keepdims=True)
    shifted = logits - m
    logz = jnp.log(jnp.sum(jnp.exp(shifted), axis=-1, keepdims=True))
    log_p = shifted - logz                                     # (N, B, C)

    # Target log-probs: static slice (model_id is a compile-time constant).
    t_ls = log_p[model_id]                                     # (B, C)

    # --- self edge: cross-entropy against integer labels (mean over batch) ---
    n_b, n_c = t_ls.shape
    cls_iota = jax.lax.broadcasted_iota(jnp.int32, (n_b, n_c), 1)
    onehot_mask = cls_iota == labels_ref[...]                  # (B, C) bool
    ce = -jnp.sum(jnp.where(onehot_mask, t_ls, 0.0)) * inv_batch

    # --- distillation edges: KL(softmax(src) || softmax(tgt)), batchmean ---
    p_src = jnp.exp(log_p)                                     # (N, B, C)
    kl_elem = p_src * (log_p - t_ls[None])                     # (N, B, C)
    kl_lane = jnp.sum(kl_elem, axis=2, keepdims=True)          # (N, B, 1)
    kl_per_edge = jnp.sum(kl_lane, axis=1, keepdims=True)      # (N, 1, 1)
    # self edge is excluded via its zeroed gate (its KL is exactly 0 anyway).
    kl_total = jnp.sum(kl_per_edge * kl_gate_ref[...]) * inv_batch

    total = gate_smem_ref[model_id] * ce + kl_total
    out_ref[...] = jnp.reshape(total, (1, 1))


def edges_forward(model_id, outputs, labels, gate_weights):
    """Pallas implementation of Edges.forward.

    Args:
      model_id:      python int, index of the target model.
      outputs:       [N, B, C] float32 stacked logits.
      labels:        [N, B] int32 integer labels.
      gate_weights:  [N] float32, w_i(epoch) (gate = multiplicative epoch schedule).
    Returns:
      scalar float32 loss.
    """
    n_models, batch, n_classes = outputs.shape
    if model_id < 0 or model_id >= n_models:
        raise ValueError(f"Invalid model_id: {model_id}")

    gate_weights = gate_weights.astype(jnp.float32)
    # Gate vector used for the KL edges: the self edge is masked out here (its
    # criterion is CE, handled separately in-kernel).
    kl_gates = gate_weights.at[model_id].set(0.0).reshape(n_models, 1, 1)
    labels_t = labels[model_id].astype(jnp.int32).reshape(batch, 1)

    kernel = functools.partial(_edges_kernel, model_id, 1.0 / batch)

    grid_spec = pltpu.PrefetchScalarGridSpec(
        num_scalar_prefetch=0,
        grid=(1,),
        in_specs=[
            # full gate table: small 1-D array, kept in SMEM (scalar-indexed)
            pl.BlockSpec(memory_space=pltpu.SMEM),
            # per-edge KL gate weights (self edge zeroed), broadcast inside kernel
            pl.BlockSpec((n_models, 1, 1), lambda i: (0, 0, 0)),
            # target-model integer labels (one column, compared against a class iota)
            pl.BlockSpec((batch, 1), lambda i: (0, 0)),
            # all logits as a single resident block
            pl.BlockSpec((n_models, batch, n_classes), lambda i: (0, 0, 0)),
        ],
        out_specs=pl.BlockSpec((1, 1), lambda i: (0, 0)),
    )

    out = pl.pallas_call(
        kernel,
        out_shape=jax.ShapeDtypeStruct((1, 1), jnp.float32),
        grid_spec=grid_spec,
        compiler_params=pltpu.CompilerParams(
            dimension_semantics=("arbitrary",)),
    )(gate_weights, kl_gates, labels_t, outputs.astype(jnp.float32))
    return out[0, 0]


def edges_reference(model_id, outputs, labels, gate_weights):
    """Pure-JAX reference mirroring the PyTorch Edges.forward."""
    tgt = outputs[model_id]
    t_ls = jax.nn.log_softmax(tgt, axis=-1)
    batch = tgt.shape[0]
    losses = []
    for i in range(outputs.shape[0]):
        if i == model_id:
            picked = jnp.take_along_axis(t_ls, labels[model_id][:, None], axis=-1)
            ce = -jnp.sum(picked) / batch
            losses.append(gate_weights[i] * ce)
        else:
            s_ls = jax.nn.log_softmax(outputs[i], axis=-1)
            p = jnp.exp(s_ls)
            kl = jnp.sum(p * (s_ls - t_ls)) / batch
            losses.append(gate_weights[i] * kl)
    return jnp.sum(jnp.stack(losses))


if __name__ == "__main__":
    N_MODELS, BATCH, N_CLASSES = 4, 8, 128
    MODEL_ID = 1
    EPOCH = 10
    END_EPOCH = 200

    key = jax.random.PRNGKey(0)
    k_out, k_lab = jax.random.split(key)
    outputs = jax.random.normal(k_out, (N_MODELS, BATCH, N_CLASSES), dtype=jnp.float32)
    labels = jax.random.randint(k_lab, (N_MODELS, BATCH), 0, N_CLASSES, dtype=jnp.int32)

    # Gates: deterministic epoch-dependent scalar schedules (Through / Linear / Cutoff / Through).
    gate_fns = [
        lambda e: 1.0,                         # ThroughGate
        lambda e: min(e / END_EPOCH, 1.0),     # LinearGate
        lambda e: 0.0 if e < 5 else 1.0,       # CutoffGate
        lambda e: 1.0,                         # ThroughGate
    ]
    gate_weights = jnp.array([f(EPOCH) for f in gate_fns], dtype=jnp.float32)

    loss = edges_forward(MODEL_ID, outputs, labels, gate_weights)
    loss = jax.block_until_ready(loss)

    ref = edges_reference(MODEL_ID, outputs, labels, gate_weights)
    assert jnp.allclose(loss, ref, rtol=1e-5, atol=1e-5), (loss, ref)

    print("KERNEL_OK")
</pallas_src>

<mosaic_0001>
module attributes {stable_mosaic.version = 11 : i64} {
  func.func @_edges_kernel(%arg0: i32, %arg1: memref<4xf32, #tpu.memory_space<smem>>, %arg2: memref<4x1x1xf32, #tpu.memory_space<vmem>>, %arg3: memref<8x1xi32, #tpu.memory_space<vmem>>, %arg4: memref<4x8x128xf32, #tpu.memory_space<vmem>>, %arg5: memref<1x1xf32, #tpu.memory_space<vmem>>) attributes {dimension_semantics = [#tpu.dimension_semantics<arbitrary>], iteration_bounds = array<i64: 1>, scalar_prefetch = 0 : i64, scratch_operands = 0 : i64, tpu.core_type = #tpu.core_type<tc>, window_params = [{transform_indices = @transform_0, window_bounds = array<i64: 4>}, {pipeline_mode = #tpu.pipeline_mode<synchronous>, transform_indices = @transform_1, window_bounds = array<i64: 4, 1, 1>}, {pipeline_mode = #tpu.pipeline_mode<synchronous>, transform_indices = @transform_2, window_bounds = array<i64: 8, 1>}, {pipeline_mode = #tpu.pipeline_mode<synchronous>, transform_indices = @transform_3, window_bounds = array<i64: 4, 8, 128>}, {pipeline_mode = #tpu.pipeline_mode<synchronous>, transform_indices = @transform_4, window_bounds = array<i64: 1, 1>}]} {
    %c0 = arith.constant 0 : index
    %c0_0 = arith.constant 0 : index
    %c0_1 = arith.constant 0 : index
    %0 = vector.load %arg4[%c0, %c0_0, %c0_1] : memref<4x8x128xf32, #tpu.memory_space<vmem>>, vector<4x8x128xf32>
    %cst = arith.constant dense<0xFF800000> : vector<4x8xf32>
    %1 = vector.multi_reduction <maximumf>, %0, %cst [2] : vector<4x8x128xf32> to vector<4x8xf32>
    %2 = vector.shape_cast %1 : vector<4x8xf32> to vector<4x8x1xf32>
    %3 = vector.broadcast %2 : vector<4x8x1xf32> to vector<4x8x128xf32>
    %4 = arith.subf %0, %3 : vector<4x8x128xf32>
    %5 = math.exp %4 : vector<4x8x128xf32>
    %cst_2 = arith.constant dense<0.000000e+00> : vector<4x8xf32>
    %6 = vector.multi_reduction <add>, %5, %cst_2 [2] : vector<4x8x128xf32> to vector<4x8xf32>
    %7 = vector.shape_cast %6 : vector<4x8xf32> to vector<4x8x1xf32>
    %8 = math.log %7 : vector<4x8x1xf32>
    %9 = vector.broadcast %8 : vector<4x8x1xf32> to vector<4x8x128xf32>
    %10 = arith.subf %4, %9 : vector<4x8x128xf32>
    %11 = vector.extract_strided_slice %10 {offsets = [1, 0, 0], sizes = [1, 8, 128], strides = [1, 1, 1]} : vector<4x8x128xf32> to vector<1x8x128xf32>
    %12 = vector.shape_cast %11 : vector<1x8x128xf32> to vector<8x128xf32>
    %13 = tpu.iota {dimensions = array<i32: 1>} : vector<8x128xi32>
    %c0_3 = arith.constant 0 : index
    %c0_4 = arith.constant 0 : index
    %14 = vector.load %arg3[%c0_3, %c0_4] : memref<8x1xi32, #tpu.memory_space<vmem>>, vector<8x1xi32>
    %15 = vector.broadcast %14 : vector<8x1xi32> to vector<8x128xi32>
    %16 = arith.cmpi eq, %13, %15 : vector<8x128xi32>
    %cst_5 = arith.constant 0.000000e+00 : f32
    %17 = vector.broadcast %cst_5 : f32 to vector<8x128xf32>
    %18 = arith.select %16, %12, %17 : vector<8x128xi1>, vector<8x128xf32>
    %19 = vector.shape_cast %18 : vector<8x128xf32> to vector<1x8x128xf32>
    %cst_6 = arith.constant dense<0.000000e+00> : vector<1xf32>
    %20 = vector.multi_reduction <add>, %19, %cst_6 [1, 2] : vector<1x8x128xf32> to vector<1xf32>
    %21 = vector.shape_cast %20 : vector<1xf32> to vector<1x1x1xf32>
    %22 = vector.extract %21[0, 0, 0] : f32 from vector<1x1x1xf32>
    %cst_7 = arith.constant 0.000000e+00 : f32
    %23 = arith.subf %cst_7, %22 : f32
    %cst_8 = arith.constant 1.250000e-01 : f32
    %24 = arith.mulf %23, %cst_8 : f32
    %25 = math.exp %10 : vector<4x8x128xf32>
    %26 = vector.shape_cast %12 : vector<8x128xf32> to vector<1x8x128xf32>
    %27 = vector.broadcast %26 : vector<1x8x128xf32> to vector<4x8x128xf32>
    %28 = arith.subf %10, %27 : vector<4x8x128xf32>
    %29 = arith.mulf %25, %28 : vector<4x8x128xf32>
    %cst_9 = arith.constant dense<0.000000e+00> : vector<4x8xf32>
    %30 = vector.multi_reduction <add>, %29, %cst_9 [2] : vector<4x8x128xf32> to vector<4x8xf32>
    %31 = vector.shape_cast %30 : vector<4x8xf32> to vector<4x8x1xf32>
    %cst_10 = arith.constant dense<0.000000e+00> : vector<4x1xf32>
    %32 = vector.multi_reduction <add>, %31, %cst_10 [1] : vector<4x8x1xf32> to vector<4x1xf32>
    %33 = vector.shape_cast %32 : vector<4x1xf32> to vector<4x1x1xf32>
    %c0_11 = arith.constant 0 : index
    %c0_12 = arith.constant 0 : index
    %c0_13 = arith.constant 0 : index
    %34 = vector.load %arg2[%c0_11, %c0_12, %c0_13] : memref<4x1x1xf32, #tpu.memory_space<vmem>>, vector<4x1x1xf32>
    %35 = arith.mulf %33, %34 : vector<4x1x1xf32>
    %36 = vector.shape_cast %35 : vector<4x1x1xf32> to vector<1x4x1x1xf32>
    %cst_14 = arith.constant dense<0.000000e+00> : vector<1xf32>
    %37 = vector.multi_reduction <add>, %36, %cst_14 [1, 2, 3] : vector<1x4x1x1xf32> to vector<1xf32>
    %38 = vector.shape_cast %37 : vector<1xf32> to vector<1x1x1x1xf32>
    %39 = vector.extract %38[0, 0, 0, 0] : f32 from vector<1x1x1x1xf32>
    %cst_15 = arith.constant 1.250000e-01 : f32
    %40 = arith.mulf %39, %cst_15 : f32
    %c1 = arith.constant 1 : index
    %41 = memref.load %arg1[%c1] : memref<4xf32, #tpu.memory_space<smem>>
    %42 = arith.mulf %41, %24 : f32
    %43 = arith.addf %42, %40 : f32
    %44 = vector.broadcast %43 : f32 to vector<1x1xf32>
    %c0_16 = arith.constant 0 : index
    %c0_17 = arith.constant 0 : index
    %45 = vector.load %arg5[%c0_16, %c0_17] : memref<1x1xf32, #tpu.memory_space<vmem>>, vector<1x1xf32>
    tpu.vector_store %arg5[%c0_16, %c0_17], %44 {strides = array<i32>} : memref<1x1xf32, #tpu.memory_space<vmem>>, vector<1x1xf32>,
    return
  }
  func.func @transform_0(%arg0: i32) -> i32 {
    %c0_i32 = arith.constant 0 : i32
    %c0_i32_0 = arith.constant 0 : i32
    return %c0_i32 : i32
  }
  func.func @transform_1(%arg0: i32) -> (i32, i32, i32) {
    %c0_i32 = arith.constant 0 : i32
    %c0_i32_0 = arith.constant 0 : i32
    %c0_i32_1 = arith.constant 0 : i32
    %c0_i32_2 = arith.constant 0 : i32
    return %c0_i32, %c0_i32_0, %c0_i32_1 : i32, i32, i32
  }
  func.func @transform_2(%arg0: i32) -> (i32, i32) {
    %c0_i32 = arith.constant 0 : i32
    %c0_i32_0 = arith.constant 0 : i32
    %c0_i32_1 = arith.constant 0 : i32
    return %c0_i32, %c0_i32_0 : i32, i32
  }
  func.func @transform_3(%arg0: i32) -> (i32, i32, i32) {
    %c0_i32 = arith.constant 0 : i32
    %c0_i32_0 = arith.constant 0 : i32
    %c0_i32_1 = arith.constant 0 : i32
    %c0_i32_2 = arith.constant 0 : i32
    return %c0_i32, %c0_i32_0, %c0_i32_1 : i32, i32, i32
  }
  func.func @transform_4(%arg0: i32) -> (i32, i32) {
    %c0_i32 = arith.constant 0 : i32
    %c0_i32_0 = arith.constant 0 : i32
    %c0_i32_1 = arith.constant 0 : i32
    return %c0_i32, %c0_i32_0 : i32, i32
  }
}

</mosaic_0001>

<llo_original>
// kernel: tpu_custom_call.1
$region0: #{tpu_custom_call.1}
  #allocation0 [shape = 'u32[]', space=smem, size = 0x4, offset = 0x4, fixed_abs, tag = 'smem constant byte address 0x4 - core index']
  #allocation1 [shape = 'u32[144,128]{1,0:T(1,128)}', space=vmem, size = 0x12000, scoped, tag = 'internal scratch']
  %s0 = inlined_call_operand.vmem [shape: f32[4], index: 0, kind: input, shape index: {}]
  %s1 = inlined_call_operand.vmem [shape: f32[4,1,1], index: 1, kind: input, shape index: {}]
  %s2 = inlined_call_operand.vmem [shape: s32[8,1], index: 2, kind: input, shape index: {}]
  %s3 = inlined_call_operand.hbm [shape: f32[4,8,128], index: 3, kind: input, shape index: {}]
  %s4 = inlined_call_operand.hbm [shape: f32[1,1], index: 4, kind: output, shape index: {}]
  %s5 = sld [smem:[#allocation0]]
  $region34: #{tpu_custom_call.1} parent=0
    _
  %s7 = ssub.s32 1, %s5
  %s8 = scalar_select 0, %s7, %s5
  $region1: #{tpu_custom_call.1} parent=0
    #allocation2 [shape = 'u8[512]{0}', space=smem, size = 0x200, scoped, tag = 'input window, operand 0, single buffered']
    #allocation3 [shape = 's32[1]{0}', space=sflag, size = 0x4, scoped, tag = 'scoped memory for tpu_custom_call.1']
    #allocation4 [shape = 's32[1]{0}', space=sflag, size = 0x4, scoped, tag = 'scoped memory for tpu_custom_call.1']
    #allocation5 [shape = 's32[1]{0}', space=sflag, size = 0x4, scoped, tag = 'scoped memory for tpu_custom_call.1']
    #allocation6 [shape = 'u8[16384]{0}', space=vmem, size = 0x4000, scoped, tag = 'input window, operand 3, single buffered']
    #allocation7 [shape = 'u8[512]{0}', space=vmem, size = 0x400, scoped, tag = 'output window, operand 0, single buffered']
    %9 = vsyncpa [#allocation5], 0
    %10 = vsyncpa [#allocation3], 0
    %11 = vsyncpa [#allocation4], 0
    // Predicated region
    $region2: #{tpu_custom_call.1} parent=1 // pred_check
      _
    $region3: #{tpu_custom_call.1} parent=1 // pred_check_branch
      %13 = sbr.rel (0) target = $region5
    $region4: #{tpu_custom_call.1} parent=1 // pred_region
      %s15 = ssub.s32 16, 16
      %16 = vsyncadd [#allocation5], %s15
      %s18 = sshll.u32 %s0, 4
      %s19 = int_to_ptr.vmem [resolvable:$true] %s18
      %21 = dma.vmem_to_smem %s19, 16, [#allocation2], [#allocation5]
    $region5: #{tpu_custom_call.1} parent=1 // pred_fallthru
      _
    // Predicated region
    $region6: #{tpu_custom_call.1} parent=1 // pred_check
      _
    $region7: #{tpu_custom_call.1} parent=1 // pred_check_branch
      %23 = sbr.rel (0) target = $region9
    $region8: #{tpu_custom_call.1} parent=1 // pred_region
      _
    $region9: #{tpu_custom_call.1} parent=1 // pred_fallthru
      _
    // Predicated region
    $region10: #{tpu_custom_call.1} parent=1 // pred_check
      _
    $region11: #{tpu_custom_call.1} parent=1 // pred_check_branch
      %25 = sbr.rel (0) target = $region13
    $region12: #{tpu_custom_call.1} parent=1 // pred_region
      _
    $region13: #{tpu_custom_call.1} parent=1 // pred_fallthru
      _
    // Predicated region
    $region14: #{tpu_custom_call.1} parent=1 // pred_check
      _
    $region15: #{tpu_custom_call.1} parent=1 // pred_check_branch
      %27 = sbr.rel (0) target = $region17
    $region16: #{tpu_custom_call.1} parent=1 // pred_region
      %s29 = ssub.s32 512, 512
      %30 = vsyncadd [#allocation3], %s29
      %s31 = sshll.u32 [#allocation6], 4
      %s32 = int_to_ptr.vmem [resolvable:$true] %s31
      %37 = dma.hbm_to_vmem [thread:$0]  %s3, 512, %s32, [#allocation3], 128, 128, 8
    $region17: #{tpu_custom_call.1} parent=1 // pred_fallthru
      _
    // Predicated region
    $region18: #{tpu_custom_call.1} parent=1 // pred_check
      _
    $region19: #{tpu_custom_call.1} parent=1 // pred_check_branch
      %39 = sbr.rel (0) target = $region21
    $region20: #{tpu_custom_call.1} parent=1 // pred_region
      %40 = dma.done [#allocation5], 16
    $region21: #{tpu_custom_call.1} parent=1 // pred_fallthru
      _
    // Predicated region
    $region22: #{tpu_custom_call.1} parent=1 // pred_check
      _
    $region23: #{tpu_custom_call.1} parent=1 // pred_check_branch
      %42 = sbr.rel (0) target = $region25
    $region24: #{tpu_custom_call.1} parent=1 // pred_region
      %43 = dma.done [#allocation3], 512
    $region25: #{tpu_custom_call.1} parent=1 // pred_fallthru
      _
    %44 = sfence
    %v45 = vld [vmem:[#allocation6] sm:$0xff]
    %v46 = vld [vmem:[#allocation6 + $0x8] sm:$0xff]
    %v47 = vld [vmem:[#allocation6 + $0x10] sm:$0xff]
    %v48 = vld [vmem:[#allocation6 + $0x18] sm:$0xff]
    %49 = vmax.xlane.f32.xlu0 %v45
    %v50 = vpop.xlane.xlu0 %49
    %51 = vmax.xlane.f32.xlu0 %v46
    %v52 = vpop.xlane.xlu0 %51
    %53 = vmax.xlane.f32.xlu0 %v47
    %v54 = vpop.xlane.xlu0 %53
    %55 = vmax.xlane.f32.xlu0 %v48
    %v56 = vpop.xlane.xlu0 %55
    %v57 = vsub.f32 %v45, %v50
    %v58 = vsub.f32 %v46, %v52
    %v59 = vsub.f32 %v47, %v54
    %v60 = vsub.f32 %v48, %v56
    %v61 = vmul.f32 %v57, 1.442695
    %v62 = vpow.pop %v61
    %v63 = vmul.f32 %v58, 1.442695
    %v64 = vpow.pop %v63
    %v65 = vmul.f32 %v59, 1.442695
    %v66 = vpow.pop %v65
    %v67 = vmul.f32 %v60, 1.442695
    %v68 = vpow.pop %v67
    %69 = vadd.xlane.f32.xlu0 %v62
    %v70 = vpop.xlane.xlu0 %69
    %71 = vadd.xlane.f32.xlu0 %v64
    %v72 = vpop.xlane.xlu0 %71
    %73 = vadd.xlane.f32.xlu0 %v66
    %v74 = vpop.xlane.xlu0 %73
    %75 = vadd.xlane.f32.xlu0 %v68
    %v76 = vpop.xlane.xlu0 %75
    %v77 = vlog2.pop %v70
    %v78 = vmul.f32 %v77, 0.6931472
    %v79 = vlog2.pop %v72
    %v80 = vmul.f32 %v79, 0.6931472
    %v81 = vlog2.pop %v74
    %v82 = vmul.f32 %v81, 0.6931472
    %v83 = vlog2.pop %v76
    %v84 = vmul.f32 %v83, 0.6931472
    %v85 = vsub.f32 %v57, %v78
    %v86 = vsub.f32 %v58, %v80
    %v87 = vsub.f32 %v59, %v82
    %v88 = vsub.f32 %v60, %v84
    %v89 = vlaneseq
    %v90 = vand.u32 %v89, 127
    %v91 = vld [vmem:[%s2] sm:$0xff]
    %92 = vset.pattern.permute.xlu0 0
    %93 = vperm.xlu0 %92, %v91
    %v94 = vpop.permute.xlu0 %93
    %vm95 = vcmp.eq.s32.totalorder %v90, %v94
    %v96 = vsel %vm95, %v86, 0.0
    %97 = vadd.xlane.f32.xlu0 %v96
    %v98 = vpop.xlane.xlu0 %97
    %v99 = vrot.slane %v98, 4
    %v100 = vadd.f32 %v98, %v99
    %v101 = vrot.slane %v100, 2
    %v102 = vadd.f32 %v100, %v101
    %v103 = vrot.slane %v102, 1
    %v104 = vadd.f32 %v102, %v103
    %s105 = vtos %v104
    %s106 = ssub.f32 0.0, %s105
    %s107 = smul.f32 %s106, 0.125
    %v108 = vmul.f32 %v85, 1.442695
    %v109 = vpow.pop %v108
    %v110 = vmul.f32 %v86, 1.442695
    %v111 = vpow.pop %v110
    %v112 = vmul.f32 %v87, 1.442695
    %v113 = vpow.pop %v112
    %v114 = vmul.f32 %v88, 1.442695
    %v115 = vpow.pop %v114
    %v116 = vsub.f32 %v85, %v86
    %v117 = vsub.f32 %v86, %v86
    %v118 = vsub.f32 %v87, %v86
    %v119 = vsub.f32 %v88, %v86
    %v120 = vmul.f32 %v109, %v116
    %v121 = vmul.f32 %v111, %v117
    %v122 = vmul.f32 %v113, %v118
    %v123 = vmul.f32 %v115, %v119
    %124 = vadd.xlane.f32.xlu0 %v120
    %v125 = vpop.xlane.xlu0 %124
    %126 = vadd.xlane.f32.xlu0 %v121
    %v127 = vpop.xlane.xlu0 %126
    %128 = vadd.xlane.f32.xlu0 %v122
    %v129 = vpop.xlane.xlu0 %128
    %130 = vadd.xlane.f32.xlu0 %v123
    %v131 = vpop.xlane.xlu0 %130
    %v132 = vrot.slane %v125, 4
    %v133 = vadd.f32 %v125, %v132
    %v134 = vrot.slane %v133, 2
    %v135 = vadd.f32 %v133, %v134
    %v136 = vrot.slane %v135, 1
    %v137 = vadd.f32 %v135, %v136
    %v138 = vrot.slane %v127, 4
    %v139 = vadd.f32 %v127, %v138
    %v140 = vrot.slane %v139, 2
    %v141 = vadd.f32 %v139, %v140
    %v142 = vrot.slane %v141, 1
    %v143 = vadd.f32 %v141, %v142
    %v144 = vrot.slane %v129, 4
    %v145 = vadd.f32 %v129, %v144
    %v146 = vrot.slane %v145, 2
    %v147 = vadd.f32 %v145, %v146
    %v148 = vrot.slane %v147, 1
    %v149 = vadd.f32 %v147, %v148
    %v150 = vrot.slane %v131, 4
    %v151 = vadd.f32 %v131, %v150
    %v152 = vrot.slane %v151, 2
    %v153 = vadd.f32 %v151, %v152
    %v154 = vrot.slane %v153, 1
    %v155 = vadd.f32 %v153, %v154
    %v156 = vld [vmem:[%s1] sm:$0x1]
    %v157 = vld [vmem:[%s1 + $0x1] sm:$0x1]
    %v158 = vld [vmem:[%s1 + $0x2] sm:$0x1]
    %v159 = vld [vmem:[%s1 + $0x3] sm:$0x1]
    %v160 = vmul.f32 %v137, %v156
    %v161 = vmul.f32 %v143, %v157
    %v162 = vmul.f32 %v149, %v158
    %v163 = vmul.f32 %v155, %v159
    %vm164 = vcmask 0
    %v165 = vsel %vm164, %v160, 0.0
    %v166 = vsel %vm164, %v161, 0.0
    %v167 = vadd.f32 %v165, %v166
    %v168 = vsel %vm164, %v162, 0.0
    %v169 = vadd.f32 %v167, %v168
    %v170 = vsel %vm164, %v163, 0.0
    %v171 = vadd.f32 %v169, %v170
    %172 = vadd.xlane.f32.xlu0 %v171
    %v173 = vpop.xlane.xlu0 %172
    %v174 = vrot.slane %v173, 4
    %v175 = vadd.f32 %v173, %v174
    %v176 = vrot.slane %v175, 2
    %v177 = vadd.f32 %v175, %v176
    %v178 = vrot.slane %v177, 1
    %v179 = vadd.f32 %v177, %v178
    %s180 = vtos %v179
    %s181 = smul.f32 %s180, 0.125
    %s182 = sld [smem:[#allocation2 + $0x1]]
    %s183 = smul.f32 %s182, %s107
    %s184 = sadd.f32 %s183, %s181
    %v185 = vstv %s184
    %186 = vst.msk [vmem:[#allocation7] sm:$0x1] %vm164, %v185
    // Predicated region
    $region26: #{tpu_custom_call.1} parent=1 // pred_check
      _
    $region27: #{tpu_custom_call.1} parent=1 // pred_check_branch
      %188 = sbr.rel (0) target = $region29
    $region28: #{tpu_custom_call.1} parent=1 // pred_region
      %s190 = ssub.s32 16, 16
      %191 = vsyncadd [#allocation4], %s190
      %s193 = sshll.u32 [#allocation7], 4
      %s194 = int_to_ptr.vmem [resolvable:$true] %s193
      %196 = dma.vmem_to_hbm [thread:$0]  %s194, 16, %s4, [#allocation4]
    $region29: #{tpu_custom_call.1} parent=1 // pred_fallthru
      _
    // Predicated region
    $region30: #{tpu_custom_call.1} parent=1 // pred_check
      _
    $region31: #{tpu_custom_call.1} parent=1 // pred_check_branch
      %198 = sbr.rel (0) target = $region33
    $region32: #{tpu_custom_call.1} parent=1 // pred_region
      %199 = dma.done [#allocation4], 16
    $region33: #{tpu_custom_call.1} parent=1 // pred_fallthru
      _
    %200 = vsyncpa [#allocation3], 1
    %201 = vsyncpa [#allocation4], 1
    %202 = vsyncpa [#allocation5], 1

</llo_original>
